<compile_context>
chip_gen: v7x
topology: tpu7x:2x2x1
jax: 0.10.0
libtpu: 0.0.40
codegen_flags: <defaults>
</compile_context>

<pallas_src>
import functools

import jax
import jax.numpy as jnp
from jax.experimental import pallas as pl
from jax.experimental.pallas import tpu as pltpu


def _focal_loss_kernel(preds_ref, labels_ref, alpha_t_ref, psum_ref, *, gamma):
    # preds_ref  : (T, C)   logits row-tile (original dtype; last block may read OOB rows)
    # labels_ref : (T, 1)   int32 class id per row (-1 on padded / OOB rows)
    # alpha_t_ref: (T, 1)   f32 alpha[label] per row (0 on padded / OOB rows)
    # psum_ref   : (1,8,128) f32 tile filled with this block's partial loss sum
    x = preds_ref[...].astype(jnp.float32)                      # (T, C)

    # numerically stable log-softmax pieces (class axis = lanes, masked to C)
    m = jnp.max(x, axis=-1, keepdims=True)                      # (T, 1)
    z = x - m
    denom = jnp.sum(jnp.exp(z), axis=-1, keepdims=True)         # (T, 1)

    # gather shifted logit at the label via one-hot compare (no TPU gather op)
    labels = labels_ref[...]                                    # (T, 1)
    col = jax.lax.broadcasted_iota(jnp.int32, x.shape, dimension=1)
    onehot = col == labels                                      # all-False for pad rows
    z_t = jnp.sum(jnp.where(onehot, z, 0.0), axis=-1, keepdims=True)   # (T, 1)

    logp_t = z_t - jnp.log(denom)                               # log_softmax[label]
    p_t = jnp.exp(logp_t)                                       # softmax[label]
    one_minus = 1.0 - p_t        # matches the PyTorch reference's numerics

    # integer gamma -> VPU multiplies; non-integer falls back to power (EUP)
    g = float(gamma)
    if g == int(g) and 0 <= int(g) <= 8:
        w = jnp.ones_like(one_minus)
        for _ in range(int(g)):
            w = w * one_minus
    else:
        w = jnp.power(one_minus, g)

    a_t = alpha_t_ref[...]                                      # (T, 1)
    loss = -a_t * w * logp_t                                    # (T, 1)
    # padded / out-of-bounds rows may hold NaN/Inf garbage -> hard-zero them
    loss = jnp.where(labels >= 0, loss, 0.0)

    # per-tile partial sum, broadcast into one lane-dense (8,128) tile
    psum_ref[...] = jnp.full(psum_ref.shape, jnp.sum(loss), dtype=psum_ref.dtype)


def focal_loss_pallas(preds, labels, alpha, gamma=2.0, size_average=False,
                      row_tile=None):
    """Pallas focal loss. preds: [..., C] logits, labels: [...] int, alpha: [C] or scalar."""
    C = preds.shape[-1]
    preds2 = preds.reshape(-1, C)           # keep original dtype for HBM/DMA side
    labels1 = labels.reshape(-1).astype(jnp.int32)
    R = preds2.shape[0]

    # alpha handling matches the PyTorch module: list -> per-class, scalar -> [a, 1-a, ...]
    if isinstance(alpha, (float, int)):
        a = float(alpha)
        alpha_arr = jnp.asarray([a] + [1.0 - a] * (C - 1), jnp.float32)
    else:
        alpha_arr = jnp.asarray(alpha, jnp.float32).reshape(-1)
    a_t = alpha_arr[labels1]                # (R,) cheap XLA gather in the wrapper

    itemsize = jnp.dtype(preds2.dtype).itemsize
    quant = 16 if itemsize < 4 else 8       # 16-bit dtypes use the (16,128) min tile
    lanes = ((C + 127) // 128) * 128        # VMEM lane-padded width of one block

    # VMEM budget per block: 2x double-buffered input + ~4x f32 intermediates.
    budget = 24 * 1024 * 1024
    per_row_vmem = 2 * lanes * itemsize + 4 * lanes * 4
    max_rows = max(quant, (budget // per_row_vmem) // quant * quant)

    if row_tile is None:
        row_tile = 8192
    R_q = ((R + quant - 1) // quant) * quant
    row_tile = int(min(int(row_tile), max_rows, R_q))
    row_tile = max(quant, (row_tile // quant) * quant)

    grid_n = (R + row_tile - 1) // row_tile
    R_pad = grid_n * row_tile
    if R_pad != R:
        # Pad ONLY the tiny per-row side arrays; logits stay unpadded in HBM.
        labels1 = jnp.pad(labels1, (0, R_pad - R), constant_values=-1)
        a_t = jnp.pad(a_t, (0, R_pad - R))
    labels2 = labels1.reshape(-1, 1)
    a_t2 = a_t.reshape(-1, 1)

    # vmem_limit from the actual block footprint (+ headroom), capped for v7x.
    in_block = row_tile * lanes * itemsize
    f32_block = row_tile * lanes * 4
    vmem_limit = 2 * in_block + 6 * f32_block + (2 << 20)
    vmem_limit = int(min(max(vmem_limit, 4 * 1024 * 1024), 32 * 1024 * 1024))

    kernel = functools.partial(_focal_loss_kernel, gamma=float(gamma))

    psums = pl.pallas_call(
        kernel,
        out_shape=jax.ShapeDtypeStruct((grid_n, 8, 128), jnp.float32),
        grid_spec=pltpu.PrefetchScalarGridSpec(
            num_scalar_prefetch=0,
            grid=(grid_n,),
            in_specs=[
                pl.BlockSpec((row_tile, C), lambda i: (i, 0)),   # logits, full C (no pad)
                pl.BlockSpec((row_tile, 1), lambda i: (i, 0)),   # labels
                pl.BlockSpec((row_tile, 1), lambda i: (i, 0)),   # alpha[label]
            ],
            out_specs=pl.BlockSpec((1, 8, 128), lambda i: (i, 0, 0)),
        ),
        compiler_params=pltpu.CompilerParams(
            dimension_semantics=("parallel",),    # disjoint output tiles -> v7x dual-TC
            vmem_limit_bytes=vmem_limit,
        ),
    )(preds2, labels2, a_t2)

    total = jnp.sum(psums[:, 0, 0])               # one partial sum per tile
    if size_average:
        total = total / jnp.float32(R)
    return total


def _reference(preds, labels, alpha, gamma=2.0, size_average=False):
    C = preds.shape[-1]
    p = preds.reshape(-1, C).astype(jnp.float32)
    y = labels.reshape(-1)
    logsoft = jax.nn.log_softmax(p, axis=-1)
    soft = jnp.exp(logsoft)
    p_t = jnp.take_along_axis(soft, y[:, None], axis=1)[:, 0]
    logp_t = jnp.take_along_axis(logsoft, y[:, None], axis=1)[:, 0]
    a_t = jnp.asarray(alpha, jnp.float32)[y]
    loss = -a_t * (1.0 - p_t) ** gamma * logp_t
    return loss.mean() if size_average else loss.sum()


if __name__ == "__main__":
    # classification-over-boxes setup: B batches, N boxes, C classes
    B, N, C = 2, 8, 4
    key = jax.random.PRNGKey(0)
    k1, k2 = jax.random.split(key)
    preds = jax.random.normal(k1, (B, N, C), dtype=jnp.float32)
    labels = jax.random.randint(k2, (B, N), 0, C, dtype=jnp.int32)

    # alpha list of length num_classes (constant-alpha path: [a, 1-a, 1-a, ...])
    a = 0.25
    alpha = [a] + [1.0 - a] * (C - 1)
    gamma = 2.0

    loss = focal_loss_pallas(preds, labels, alpha, gamma=gamma,
                             size_average=False)
    loss = jax.block_until_ready(loss)

    ref = _reference(preds, labels, alpha, gamma=gamma, size_average=False)
    assert jnp.allclose(loss, ref, rtol=1e-5, atol=1e-5), (loss, ref)

    print("KERNEL_OK")
</pallas_src>

<mosaic_0001>
module attributes {stable_mosaic.version = 11 : i64} {
  func.func @_focal_loss_kernel(%arg0: i32, %arg1: memref<16x4xf32, #tpu.memory_space<vmem>>, %arg2: memref<16x1xi32, #tpu.memory_space<vmem>>, %arg3: memref<16x1xf32, #tpu.memory_space<vmem>>, %arg4: memref<1x8x128xf32, #tpu.memory_space<vmem>>) attributes {dimension_semantics = [#tpu.dimension_semantics<parallel>], iteration_bounds = array<i64: 1>, scalar_prefetch = 0 : i64, scratch_operands = 0 : i64, tpu.core_type = #tpu.core_type<tc>, window_params = [{transform_indices = @transform_0, window_bounds = array<i64: 16, 4>}, {transform_indices = @transform_1, window_bounds = array<i64: 16, 1>}, {transform_indices = @transform_2, window_bounds = array<i64: 16, 1>}, {transform_indices = @transform_3, window_bounds = array<i64: 1, 8, 128>}]} {
    %c0 = arith.constant 0 : index
    %c0_0 = arith.constant 0 : index
    %0 = vector.load %arg1[%c0, %c0_0] : memref<16x4xf32, #tpu.memory_space<vmem>>, vector<16x4xf32>
    %cst = arith.constant dense<0xFF800000> : vector<16xf32>
    %1 = vector.multi_reduction <maximumf>, %0, %cst [1] : vector<16x4xf32> to vector<16xf32>
    %2 = vector.shape_cast %1 : vector<16xf32> to vector<16x1xf32>
    %3 = vector.broadcast %2 : vector<16x1xf32> to vector<16x4xf32>
    %4 = arith.subf %0, %3 : vector<16x4xf32>
    %5 = math.exp %4 : vector<16x4xf32>
    %cst_1 = arith.constant dense<0.000000e+00> : vector<16xf32>
    %6 = vector.multi_reduction <add>, %5, %cst_1 [1] : vector<16x4xf32> to vector<16xf32>
    %7 = vector.shape_cast %6 : vector<16xf32> to vector<16x1xf32>
    %c0_2 = arith.constant 0 : index
    %c0_3 = arith.constant 0 : index
    %8 = vector.load %arg2[%c0_2, %c0_3] : memref<16x1xi32, #tpu.memory_space<vmem>>, vector<16x1xi32>
    %9 = tpu.iota {dimensions = array<i32: 1>} : vector<16x4xi32>
    %10 = vector.broadcast %8 : vector<16x1xi32> to vector<16x4xi32>
    %11 = arith.cmpi eq, %9, %10 : vector<16x4xi32>
    %cst_4 = arith.constant 0.000000e+00 : f32
    %12 = vector.broadcast %cst_4 : f32 to vector<16x4xf32>
    %13 = arith.select %11, %4, %12 : vector<16x4xi1>, vector<16x4xf32>
    %cst_5 = arith.constant dense<0.000000e+00> : vector<16xf32>
    %14 = vector.multi_reduction <add>, %13, %cst_5 [1] : vector<16x4xf32> to vector<16xf32>
    %15 = vector.shape_cast %14 : vector<16xf32> to vector<16x1xf32>
    %16 = math.log %7 : vector<16x1xf32>
    %17 = arith.subf %15, %16 : vector<16x1xf32>
    %18 = math.exp %17 : vector<16x1xf32>
    %cst_6 = arith.constant 1.000000e+00 : f32
    %19 = vector.broadcast %cst_6 : f32 to vector<16x1xf32>
    %20 = arith.subf %19, %18 : vector<16x1xf32>
    %cst_7 = arith.constant 1.000000e+00 : f32
    %21 = vector.broadcast %cst_7 : f32 to vector<16x1xf32>
    %22 = arith.mulf %21, %20 : vector<16x1xf32>
    %23 = arith.mulf %22, %20 : vector<16x1xf32>
    %c0_8 = arith.constant 0 : index
    %c0_9 = arith.constant 0 : index
    %24 = vector.load %arg3[%c0_8, %c0_9] : memref<16x1xf32, #tpu.memory_space<vmem>>, vector<16x1xf32>
    %cst_10 = arith.constant 0.000000e+00 : f32
    %25 = vector.broadcast %cst_10 : f32 to vector<16x1xf32>
    %26 = arith.subf %25, %24 : vector<16x1xf32>
    %27 = arith.mulf %26, %23 : vector<16x1xf32>
    %28 = arith.mulf %27, %17 : vector<16x1xf32>
    %c0_i32 = arith.constant 0 : i32
    %29 = vector.broadcast %c0_i32 : i32 to vector<16x1xi32>
    %30 = arith.cmpi sge, %8, %29 : vector<16x1xi32>
    %cst_11 = arith.constant 0.000000e+00 : f32
    %31 = vector.broadcast %cst_11 : f32 to vector<16x1xf32>
    %32 = arith.select %30, %28, %31 : vector<16x1xi1>, vector<16x1xf32>
    %33 = vector.shape_cast %32 : vector<16x1xf32> to vector<1x16x1xf32>
    %cst_12 = arith.constant dense<0.000000e+00> : vector<1xf32>
    %34 = vector.multi_reduction <add>, %33, %cst_12 [1, 2] : vector<1x16x1xf32> to vector<1xf32>
    %35 = vector.shape_cast %34 : vector<1xf32> to vector<1x1x1xf32>
    %36 = vector.extract %35[0, 0, 0] : f32 from vector<1x1x1xf32>
    %37 = vector.broadcast %36 : f32 to vector<1x8x128xf32>
    %c0_13 = arith.constant 0 : index
    %c0_14 = arith.constant 0 : index
    %c0_15 = arith.constant 0 : index
    %38 = vector.load %arg4[%c0_13, %c0_14, %c0_15] : memref<1x8x128xf32, #tpu.memory_space<vmem>>, vector<1x8x128xf32>
    tpu.vector_store %arg4[%c0_13, %c0_14, %c0_15], %37 {strides = array<i32>} : memref<1x8x128xf32, #tpu.memory_space<vmem>>, vector<1x8x128xf32>,
    return
  }
  func.func @transform_0(%arg0: i32) -> (i32, i32) {
    %c0_i32 = arith.constant 0 : i32
    %c0_i32_0 = arith.constant 0 : i32
    return %arg0, %c0_i32 : i32, i32
  }
  func.func @transform_1(%arg0: i32) -> (i32, i32) {
    %c0_i32 = arith.constant 0 : i32
    %c0_i32_0 = arith.constant 0 : i32
    return %arg0, %c0_i32 : i32, i32
  }
  func.func @transform_2(%arg0: i32) -> (i32, i32) {
    %c0_i32 = arith.constant 0 : i32
    %c0_i32_0 = arith.constant 0 : i32
    return %arg0, %c0_i32 : i32, i32
  }
  func.func @transform_3(%arg0: i32) -> (i32, i32, i32) {
    %c0_i32 = arith.constant 0 : i32
    %c0_i32_0 = arith.constant 0 : i32
    %c0_i32_1 = arith.constant 0 : i32
    return %arg0, %c0_i32, %c0_i32_0 : i32, i32, i32
  }
}

</mosaic_0001>

<llo_original>
// kernel: tpu_custom_call.1
$region0: #{tpu_custom_call.1}
  #allocation0 [shape = 'u32[]', space=smem, size = 0x4, offset = 0x4, fixed_abs, tag = 'smem constant byte address 0x4 - core index']
  #allocation1 [shape = 'u32[144,128]{1,0:T(1,128)}', space=vmem, size = 0x12000, scoped, tag = 'internal scratch']
  %s0 = inlined_call_operand.vmem [shape: f32[16,4], index: 0, kind: input, shape index: {}]
  %s1 = inlined_call_operand.vmem [shape: s32[16,1], index: 1, kind: input, shape index: {}]
  %s2 = inlined_call_operand.vmem [shape: f32[16,1], index: 2, kind: input, shape index: {}]
  %s3 = inlined_call_operand.hbm [shape: f32[1,8,128], index: 3, kind: output, shape index: {}]
  %s4 = sld [smem:[#allocation0]]
  $region22: #{tpu_custom_call.1} parent=0
    _
  %s6 = ssub.s32 1, %s4
  %s7 = scalar_select 0, %s6, %s4
  $region1: #{tpu_custom_call.1} parent=0
    #allocation2 [shape = 'u8[4096]{0}', space=vmem, size = 0x1000, scoped, tag = 'output window, operand 0, single buffered']
    #allocation3 [shape = 's32[1]{0}', space=sflag, size = 0x4, scoped, tag = 'scoped memory for tpu_custom_call.1']
    %8 = vsyncpa [#allocation3], 0
    // Predicated region
    $region2: #{tpu_custom_call.1} parent=1 // pred_check
      _
    $region3: #{tpu_custom_call.1} parent=1 // pred_check_branch
      %10 = sbr.rel (0) target = $region5
    $region4: #{tpu_custom_call.1} parent=1 // pred_region
      _
    $region5: #{tpu_custom_call.1} parent=1 // pred_fallthru
      _
    // Predicated region
    $region6: #{tpu_custom_call.1} parent=1 // pred_check
      _
    $region7: #{tpu_custom_call.1} parent=1 // pred_check_branch
      %12 = sbr.rel (0) target = $region9
    $region8: #{tpu_custom_call.1} parent=1 // pred_region
      _
    $region9: #{tpu_custom_call.1} parent=1 // pred_fallthru
      _
    // Predicated region
    $region10: #{tpu_custom_call.1} parent=1 // pred_check
      _
    $region11: #{tpu_custom_call.1} parent=1 // pred_check_branch
      %14 = sbr.rel (0) target = $region13
    $region12: #{tpu_custom_call.1} parent=1 // pred_region
      _
    $region13: #{tpu_custom_call.1} parent=1 // pred_fallthru
      _
    %v15 = vld [vmem:[%s0] sm:$0xff]
    %v16 = vld [vmem:[%s0 + $0x8] sm:$0xff]
    %vm17 = vcmask 31744
    %v18 = vsel %vm17, %v15, -inf
    %19 = vmax.xlane.f32.xlu0 %v18
    %v20 = vpop.xlane.xlu0 %19
    %v21 = vsel %vm17, %v16, -inf
    %22 = vmax.xlane.f32.xlu0 %v21
    %v23 = vpop.xlane.xlu0 %22
    %v24 = vsub.f32 %v15, %v20
    %v25 = vsub.f32 %v16, %v23
    %v26 = vmul.f32 %v24, 1.442695
    %v27 = vpow.pop %v26
    %v28 = vmul.f32 %v25, 1.442695
    %v29 = vpow.pop %v28
    %v30 = vsel %vm17, %v27, 0.0
    %31 = vadd.xlane.f32.xlu0 %v30
    %v32 = vpop.xlane.xlu0 %31
    %v33 = vsel %vm17, %v29, 0.0
    %34 = vadd.xlane.f32.xlu0 %v33
    %v35 = vpop.xlane.xlu0 %34
    %v36 = vld [vmem:[%s1] sm:$0xff]
    %v37 = vld [vmem:[%s1 + $0x8] sm:$0xff]
    %v38 = vlaneseq
    %v39 = vand.u32 %v38, 127
    %40 = vset.pattern.permute.xlu0 0
    %41 = vperm.xlu0 %40, %v36
    %v42 = vpop.permute.xlu0 %41
    %43 = vset.pattern.permute.xlu0 0
    %44 = vperm.xlu0 %43, %v37
    %v45 = vpop.permute.xlu0 %44
    %vm46 = vcmp.eq.s32.totalorder %v39, %v42
    %vm47 = vcmp.eq.s32.totalorder %v39, %v45
    %v48 = vsel %vm46, %v24, 0.0
    %v49 = vsel %vm47, %v25, 0.0
    %v50 = vsel %vm17, %v48, 0.0
    %51 = vadd.xlane.f32.xlu0 %v50
    %v52 = vpop.xlane.xlu0 %51
    %v53 = vsel %vm17, %v49, 0.0
    %54 = vadd.xlane.f32.xlu0 %v53
    %v55 = vpop.xlane.xlu0 %54
    %v56 = vlog2.pop %v32
    %v57 = vmul.f32 %v56, 0.6931472
    %v58 = vlog2.pop %v35
    %v59 = vmul.f32 %v58, 0.6931472
    %v60 = vsub.f32 %v52, %v57
    %v61 = vsub.f32 %v55, %v59
    %v62 = vmul.f32 %v60, 1.442695
    %v63 = vpow.pop %v62
    %v64 = vmul.f32 %v61, 1.442695
    %v65 = vpow.pop %v64
    %v66 = vsub.f32 1.0, %v63
    %v67 = vsub.f32 1.0, %v65
    %v68 = vmul.f32 %v66, %v66
    %v69 = vmul.f32 %v67, %v67
    %v70 = vld [vmem:[%s2] sm:$0xff]
    %v71 = vld [vmem:[%s2 + $0x8] sm:$0xff]
    %v72 = vsub.f32 0.0, %v70
    %v73 = vsub.f32 0.0, %v71
    %v74 = vmul.f32 %v72, %v68
    %v75 = vmul.f32 %v73, %v69
    %v76 = vmul.f32 %v74, %v60
    %v77 = vmul.f32 %v75, %v61
    %vm78 = vcmp.ge.s32.totalorder %v36, 0
    %vm79 = vcmp.ge.s32.totalorder %v37, 0
    %v80 = vsel %vm78, %v76, 0.0
    %v81 = vsel %vm79, %v77, 0.0
    %vm82 = vcmask 7168
    %v83 = vsel %vm82, %v80, 0.0
    %v84 = vsel %vm82, %v81, 0.0
    %v85 = vadd.f32 %v83, %v84
    %86 = vadd.xlane.f32.xlu0 %v85
    %v87 = vpop.xlane.xlu0 %86
    %v88 = vrot.slane %v87, 4
    %v89 = vadd.f32 %v87, %v88
    %v90 = vrot.slane %v89, 2
    %v91 = vadd.f32 %v89, %v90
    %v92 = vrot.slane %v91, 1
    %v93 = vadd.f32 %v91, %v92
    %s94 = vtos %v93
    %v95 = vstv %s94
    %96 = vst [vmem:[#allocation2] sm:$0xff] %v95
    // Predicated region
    $region14: #{tpu_custom_call.1} parent=1 // pred_check
      _
    $region15: #{tpu_custom_call.1} parent=1 // pred_check_branch
      %98 = sbr.rel (0) target = $region17
    $region16: #{tpu_custom_call.1} parent=1 // pred_region
      %s100 = ssub.s32 128, 128
      %101 = vsyncadd [#allocation3], %s100
      %s103 = sshll.u32 [#allocation2], 4
      %s104 = int_to_ptr.vmem [resolvable:$true] %s103
      %106 = dma.vmem_to_hbm [thread:$0]  %s104, 128, %s3, [#allocation3]
    $region17: #{tpu_custom_call.1} parent=1 // pred_fallthru
      _
    // Predicated region
    $region18: #{tpu_custom_call.1} parent=1 // pred_check
      _
    $region19: #{tpu_custom_call.1} parent=1 // pred_check_branch
      %108 = sbr.rel (0) target = $region21
    $region20: #{tpu_custom_call.1} parent=1 // pred_region
      %109 = dma.done [#allocation3], 128
    $region21: #{tpu_custom_call.1} parent=1 // pred_fallthru
      _
    %110 = vsyncpa [#allocation3], 1

</llo_original>
